<compile_context>
chip_gen: v7x
topology: tpu7x:2x2x1
jax: 0.10.0
libtpu: 0.0.40
codegen_flags: <defaults>
</compile_context>

<pallas_src>
import jax
import jax.numpy as jnp
from jax.experimental import pallas as pl
from jax.experimental.pallas import tpu as pltpu


def dblock_kernel(x_ref, w1_ref, b1_ref, w2_ref, b2_ref, sel_ref, out_ref, ctx_ref):
    """Fused DBlock for one batch element in the native (C, L) layout.

    x_ref  : (1, Cin, L)        input tile
    w1_ref : (3, Cout, Cin)     conv1 per-tap weights (BN folded), compute dtype
    b1_ref : (Cout, 1)          conv1 bias (BN folded), f32
    w2_ref : (3, Cout, Cout)    conv2 per-tap weights
    b2_ref : (Cout, 1)          conv2 bias, f32
    sel_ref: (L, L//2)          0/1 even-lane selector, f32 (built once in wrapper)
    out_ref: (1, Cout, L//2)    MaxPool1d(k=2) of conv2 output
    ctx_ref: (1, Cout, L)       conv1 output (the "ctx" skip tensor)
    """
    L = x_ref.shape[2]
    compute_dtype = w1_ref.dtype

    def conv3_bn_relu(x, w_taps, b):
        # x: (C, L) in compute dtype; w_taps: (3, Cout, C); b: (Cout, 1) f32.
        # 3-tap 'same' conv as THREE accumulated matmuls (no (3C, L) im2col
        # buffer, no sublane concat of misaligned channel blocks).
        C = x.shape[0]
        zcol = jnp.zeros((C, 1), x.dtype)
        x_lm1 = jnp.concatenate([zcol, x[:, : L - 1]], axis=1)   # x[:, l-1]
        x_lp1 = jnp.concatenate([x[:, 1:], zcol], axis=1)        # x[:, l+1]
        acc = jnp.dot(w_taps[0], x_lm1, preferred_element_type=jnp.float32)
        acc = acc + jnp.dot(w_taps[1], x, preferred_element_type=jnp.float32)
        acc = acc + jnp.dot(w_taps[2], x_lp1, preferred_element_type=jnp.float32)
        return jnp.maximum(acc + b, 0.0)                         # (Cout, L) f32

    w1 = w1_ref[...]
    w2 = w2_ref[...]
    b1 = b1_ref[...]
    b2 = b2_ref[...]

    # conv1 -> ctx ; y1 stays resident in VMEM for conv2 (no HBM round trip).
    y1 = conv3_bn_relu(x_ref[0].astype(compute_dtype), w1, b1)
    ctx_ref[0] = y1.astype(ctx_ref.dtype)

    # conv2 consumes the f32 y1 (matches PyTorch: conv2 gets x, the clone is
    # only the returned skip); it is cast to the MXU compute dtype per matmul.
    y2 = conv3_bn_relu(y1.astype(compute_dtype), w2, b2)

    # MaxPool1d(kernel_size=2): pairwise max with the left-shifted copy so
    # every even lane holds max(y2[2p], y2[2p+1]); a single f32 0/1 selection
    # matmul then extracts the even lanes (exact; selector never rebuilt).
    y2_next = jnp.concatenate([y2[:, 1:], y2[:, :1]], axis=1)    # y2[:, l+1]
    m = jnp.maximum(y2, y2_next)
    pooled = jnp.dot(m, sel_ref[...], preferred_element_type=jnp.float32)
    out_ref[0] = pooled.astype(out_ref.dtype)


def dblock_forward(x, params, *, compute_dtype=jnp.float32):
    """DBlock.forward: (MaxPool1d(conv2(conv1(x))), conv1(x)) in one kernel."""
    (w1, b1), (w2, b2) = params
    N, Cin, L = x.shape
    Cout = w1.shape[0]
    assert L % 2 == 0, "MaxPool1d(2) with odd L drops the last column (PyTorch floor)"
    Lh = L // 2

    # PyTorch Conv1d weights (Cout, Cin, K) -> per-tap (K, Cout, Cin).
    w1t = jnp.transpose(w1, (2, 0, 1)).astype(compute_dtype)
    w2t = jnp.transpose(w2, (2, 0, 1)).astype(compute_dtype)
    b1c = b1.reshape(Cout, 1).astype(jnp.float32)
    b2c = b2.reshape(Cout, 1).astype(jnp.float32)

    # Even-lane selector, built once at trace time (constant across the grid).
    sel_even = (jnp.arange(L)[:, None] == 2 * jnp.arange(Lh)[None, :]).astype(jnp.float32)

    # Explicit scoped-VMEM budget from the actual buffer sum (with headroom).
    f32 = 4
    cd = jnp.dtype(compute_dtype).itemsize
    xd = x.dtype.itemsize
    vmem_bytes = (
        2 * Cin * L * xd                                  # x block (double buffered)
        + 2 * (Cout * L + Cout * Lh) * xd                 # ctx + out blocks (double buffered)
        + 2 * 3 * Cout * (Cin + Cout) * cd                # per-tap weights
        + 2 * 2 * Cout * f32                              # biases
        + 2 * L * Lh * f32                                # even-lane selector
        + (2 * Cin + 7 * Cout) * L * f32                  # in-kernel temporaries (rough)
    )
    vmem_limit = int(min(max(2 * vmem_bytes, 32 << 20), 128 << 20))

    out, ctx = pl.pallas_call(
        dblock_kernel,
        out_shape=(
            jax.ShapeDtypeStruct((N, Cout, Lh), x.dtype),
            jax.ShapeDtypeStruct((N, Cout, L), x.dtype),
        ),
        grid_spec=pltpu.PrefetchScalarGridSpec(
            num_scalar_prefetch=0,
            grid=(N,),
            in_specs=[
                pl.BlockSpec((1, Cin, L), lambda n: (n, 0, 0)),
                pl.BlockSpec((3, Cout, Cin), lambda n: (0, 0, 0)),
                pl.BlockSpec((Cout, 1), lambda n: (0, 0)),
                pl.BlockSpec((3, Cout, Cout), lambda n: (0, 0, 0)),
                pl.BlockSpec((Cout, 1), lambda n: (0, 0)),
                pl.BlockSpec((L, Lh), lambda n: (0, 0)),
            ],
            out_specs=[
                pl.BlockSpec((1, Cout, Lh), lambda n: (n, 0, 0)),
                pl.BlockSpec((1, Cout, L), lambda n: (n, 0, 0)),
            ],
        ),
        compiler_params=pltpu.CompilerParams(
            dimension_semantics=("parallel",),
            vmem_limit_bytes=vmem_limit,
        ),
    )(x, w1t, b1c, w2t, b2c, sel_even)
    return out, ctx


def fold_batchnorm1d(w_ock, b, gamma, beta, running_mean, running_var, eps=1e-5):
    """Fold eval-mode BatchNorm1d into Conv1d weight/bias (per out channel)."""
    scale = gamma / jnp.sqrt(running_var + eps)       # (Cout,)
    w_f = w_ock * scale[:, None, None]
    b_f = (b - running_mean) * scale + beta
    return w_f, b_f


def init_conv_block_params(key, cin, cout, k=3):
    """Deterministic synthetic params for Conv1d(k=3) + BatchNorm1d defaults."""
    kw, kb = jax.random.split(key)
    bound = 1.0 / float(cin * k) ** 0.5
    w = jax.random.uniform(kw, (cout, cin, k), jnp.float32, -bound, bound)
    b = jax.random.uniform(kb, (cout,), jnp.float32, -bound, bound)
    gamma = jnp.ones((cout,), jnp.float32)
    beta = jnp.zeros((cout,), jnp.float32)
    rmean = jnp.zeros((cout,), jnp.float32)
    rvar = jnp.ones((cout,), jnp.float32)
    return fold_batchnorm1d(w, b, gamma, beta, rmean, rvar)


def _reference_forward(x, params, cast_dtype=None):
    """Plain-JAX reference.  cast_dtype emulates bf16 MXU inputs (f32 accum)."""
    (w1, b1), (w2, b2) = params

    def maybe_cast(a):
        if cast_dtype is None:
            return a
        return a.astype(cast_dtype).astype(jnp.float32)

    def block(x, w, b):
        L = x.shape[2]
        xc, wc = maybe_cast(x), maybe_cast(w)
        xp = jnp.pad(xc, ((0, 0), (0, 0), (1, 1)))
        y = sum(
            jnp.einsum("ncl,oc->nol", xp[:, :, k:k + L], wc[:, :, k])
            for k in range(3)
        )
        return jnp.maximum(y + b[None, :, None], 0.0)

    ctx = block(x, w1, b1)
    y2 = block(ctx, w2, b2)
    out = jnp.max(y2.reshape(y2.shape[0], y2.shape[1], -1, 2), axis=-1)
    return out, ctx


if __name__ == "__main__":
    key = jax.random.PRNGKey(0)
    k_x, k_c1, k_c2 = jax.random.split(key, 3)

    in_channels, out_channels = 4, 8
    N, L = 2, 16

    # PyTorch-style (N, C, L) input for a 1-D ConvBlock / MaxPool1d pipeline.
    x = jax.random.normal(k_x, (N, in_channels, L), jnp.float32)
    params = (
        init_conv_block_params(k_c1, in_channels, out_channels),
        init_conv_block_params(k_c2, out_channels, out_channels),
    )

    # f32 MXU path: exact check against the plain-JAX reference.
    out, ctx = dblock_forward(x, params, compute_dtype=jnp.float32)
    out = jax.block_until_ready(out)
    ctx = jax.block_until_ready(ctx)
    ref_out, ref_ctx = _reference_forward(x, params)
    assert out.shape == (N, out_channels, L // 2)
    assert ctx.shape == (N, out_channels, L)
    assert jnp.max(jnp.abs(ctx - ref_ctx)) < 1e-4
    assert jnp.max(jnp.abs(out - ref_out)) < 1e-4

    # bf16 MXU path (recommended production setting on v5e/v6e/v7x): looser
    # check against a bf16-input-emulating reference.
    out_bf, ctx_bf = dblock_forward(x, params, compute_dtype=jnp.bfloat16)
    out_bf = jax.block_until_ready(out_bf)
    ctx_bf = jax.block_until_ready(ctx_bf)
    ref_out_bf, ref_ctx_bf = _reference_forward(x, params, cast_dtype=jnp.bfloat16)
    assert jnp.max(jnp.abs(ctx_bf - ref_ctx_bf)) < 5e-2
    assert jnp.max(jnp.abs(out_bf - ref_out_bf)) < 5e-2

    print("KERNEL_OK")
</pallas_src>

<mosaic_0001>
module attributes {stable_mosaic.version = 11 : i64} {
  func.func @dblock_kernel(%arg0: i32, %arg1: memref<1x4x16xf32, #tpu.memory_space<vmem>>, %arg2: memref<3x8x4xf32, #tpu.memory_space<vmem>>, %arg3: memref<8x1xf32, #tpu.memory_space<vmem>>, %arg4: memref<3x8x8xf32, #tpu.memory_space<vmem>>, %arg5: memref<8x1xf32, #tpu.memory_space<vmem>>, %arg6: memref<16x8xf32, #tpu.memory_space<vmem>>, %arg7: memref<1x8x8xf32, #tpu.memory_space<vmem>>, %arg8: memref<1x8x16xf32, #tpu.memory_space<vmem>>) attributes {dimension_semantics = [#tpu.dimension_semantics<parallel>], iteration_bounds = array<i64: 2>, scalar_prefetch = 0 : i64, scratch_operands = 0 : i64, tpu.core_type = #tpu.core_type<tc>, window_params = [{transform_indices = @transform_0, window_bounds = array<i64: 1, 4, 16>}, {pipeline_mode = #tpu.pipeline_mode<synchronous>, transform_indices = @transform_1, window_bounds = array<i64: 3, 8, 4>}, {pipeline_mode = #tpu.pipeline_mode<synchronous>, transform_indices = @transform_2, window_bounds = array<i64: 8, 1>}, {pipeline_mode = #tpu.pipeline_mode<synchronous>, transform_indices = @transform_3, window_bounds = array<i64: 3, 8, 8>}, {pipeline_mode = #tpu.pipeline_mode<synchronous>, transform_indices = @transform_4, window_bounds = array<i64: 8, 1>}, {pipeline_mode = #tpu.pipeline_mode<synchronous>, transform_indices = @transform_5, window_bounds = array<i64: 16, 8>}, {transform_indices = @transform_6, window_bounds = array<i64: 1, 8, 8>}, {transform_indices = @transform_7, window_bounds = array<i64: 1, 8, 16>}]} {
    %c0 = arith.constant 0 : index
    %c0_0 = arith.constant 0 : index
    %c0_1 = arith.constant 0 : index
    %0 = vector.load %arg2[%c0, %c0_0, %c0_1] : memref<3x8x4xf32, #tpu.memory_space<vmem>>, vector<3x8x4xf32>
    %c0_2 = arith.constant 0 : index
    %c0_3 = arith.constant 0 : index
    %c0_4 = arith.constant 0 : index
    %1 = vector.load %arg4[%c0_2, %c0_3, %c0_4] : memref<3x8x8xf32, #tpu.memory_space<vmem>>, vector<3x8x8xf32>
    %c0_5 = arith.constant 0 : index
    %c0_6 = arith.constant 0 : index
    %2 = vector.load %arg3[%c0_5, %c0_6] : memref<8x1xf32, #tpu.memory_space<vmem>>, vector<8x1xf32>
    %c0_7 = arith.constant 0 : index
    %c0_8 = arith.constant 0 : index
    %3 = vector.load %arg5[%c0_7, %c0_8] : memref<8x1xf32, #tpu.memory_space<vmem>>, vector<8x1xf32>
    %c0_9 = arith.constant 0 : index
    %c0_10 = arith.constant 0 : index
    %c0_11 = arith.constant 0 : index
    %4 = vector.load %arg1[%c0_9, %c0_10, %c0_11] : memref<1x4x16xf32, #tpu.memory_space<vmem>>, vector<1x4x16xf32>
    %5 = vector.shape_cast %4 : vector<1x4x16xf32> to vector<4x16xf32>
    %cst = arith.constant 0.000000e+00 : f32
    %6 = vector.broadcast %cst : f32 to vector<4x1xf32>
    %7 = vector.extract_strided_slice %5 {offsets = [0, 0], sizes = [4, 15], strides = [1, 1]} : vector<4x16xf32> to vector<4x15xf32>
    %8 = tpu.concatenate %6, %7 in 1 : vector<4x1xf32>, vector<4x15xf32> -> vector<4x16xf32>
    %9 = vector.extract_strided_slice %5 {offsets = [0, 1], sizes = [4, 15], strides = [1, 1]} : vector<4x16xf32> to vector<4x15xf32>
    %10 = tpu.concatenate %9, %6 in 1 : vector<4x15xf32>, vector<4x1xf32> -> vector<4x16xf32>
    %11 = vector.extract_strided_slice %0 {offsets = [0, 0, 0], sizes = [1, 8, 4], strides = [1, 1, 1]} : vector<3x8x4xf32> to vector<1x8x4xf32>
    %12 = vector.shape_cast %11 : vector<1x8x4xf32> to vector<8x4xf32>
    %cst_12 = arith.constant dense<0.000000e+00> : vector<8x16xf32>
    %13 = tpu.matmul %12, %8, %cst_12 {dimension_numbers = #tpu.dot_dimension_numbers<[1], [0], [0], [1], [0, 0, 1, 1], [], []>} : vector<8x4xf32>, vector<4x16xf32>, vector<8x16xf32> -> vector<8x16xf32>
    %14 = vector.extract_strided_slice %0 {offsets = [1, 0, 0], sizes = [1, 8, 4], strides = [1, 1, 1]} : vector<3x8x4xf32> to vector<1x8x4xf32>
    %15 = vector.shape_cast %14 : vector<1x8x4xf32> to vector<8x4xf32>
    %cst_13 = arith.constant dense<0.000000e+00> : vector<8x16xf32>
    %16 = tpu.matmul %15, %5, %cst_13 {dimension_numbers = #tpu.dot_dimension_numbers<[1], [0], [0], [1], [0, 0, 1, 1], [], []>} : vector<8x4xf32>, vector<4x16xf32>, vector<8x16xf32> -> vector<8x16xf32>
    %17 = arith.addf %13, %16 : vector<8x16xf32>
    %18 = vector.extract_strided_slice %0 {offsets = [2, 0, 0], sizes = [1, 8, 4], strides = [1, 1, 1]} : vector<3x8x4xf32> to vector<1x8x4xf32>
    %19 = vector.shape_cast %18 : vector<1x8x4xf32> to vector<8x4xf32>
    %cst_14 = arith.constant dense<0.000000e+00> : vector<8x16xf32>
    %20 = tpu.matmul %19, %10, %cst_14 {dimension_numbers = #tpu.dot_dimension_numbers<[1], [0], [0], [1], [0, 0, 1, 1], [], []>} : vector<8x4xf32>, vector<4x16xf32>, vector<8x16xf32> -> vector<8x16xf32>
    %21 = arith.addf %17, %20 : vector<8x16xf32>
    %22 = vector.broadcast %2 : vector<8x1xf32> to vector<8x16xf32>
    %23 = arith.addf %21, %22 : vector<8x16xf32>
    %cst_15 = arith.constant 0.000000e+00 : f32
    %24 = vector.broadcast %cst_15 : f32 to vector<8x16xf32>
    %25 = arith.maximumf %23, %24 : vector<8x16xf32>
    %c0_16 = arith.constant 0 : index
    %c0_17 = arith.constant 0 : index
    %c0_18 = arith.constant 0 : index
    %26 = vector.load %arg8[%c0_16, %c0_17, %c0_18] : memref<1x8x16xf32, #tpu.memory_space<vmem>>, vector<1x8x16xf32>
    %27 = vector.shape_cast %26 : vector<1x8x16xf32> to vector<8x16xf32>
    %28 = vector.shape_cast %25 : vector<8x16xf32> to vector<1x8x16xf32>
    tpu.vector_store %arg8[%c0_16, %c0_17, %c0_18], %28 {strides = array<i32>} : memref<1x8x16xf32, #tpu.memory_space<vmem>>, vector<1x8x16xf32>,
    %cst_19 = arith.constant 0.000000e+00 : f32
    %29 = vector.broadcast %cst_19 : f32 to vector<8x1xf32>
    %30 = vector.extract_strided_slice %25 {offsets = [0, 0], sizes = [8, 15], strides = [1, 1]} : vector<8x16xf32> to vector<8x15xf32>
    %31 = tpu.concatenate %29, %30 in 1 : vector<8x1xf32>, vector<8x15xf32> -> vector<8x16xf32>
    %32 = vector.extract_strided_slice %25 {offsets = [0, 1], sizes = [8, 15], strides = [1, 1]} : vector<8x16xf32> to vector<8x15xf32>
    %33 = tpu.concatenate %32, %29 in 1 : vector<8x15xf32>, vector<8x1xf32> -> vector<8x16xf32>
    %34 = vector.extract_strided_slice %1 {offsets = [0, 0, 0], sizes = [1, 8, 8], strides = [1, 1, 1]} : vector<3x8x8xf32> to vector<1x8x8xf32>
    %35 = vector.shape_cast %34 : vector<1x8x8xf32> to vector<8x8xf32>
    %cst_20 = arith.constant dense<0.000000e+00> : vector<8x16xf32>
    %36 = tpu.matmul %35, %31, %cst_20 {dimension_numbers = #tpu.dot_dimension_numbers<[1], [0], [0], [1], [0, 0, 1, 1], [], []>} : vector<8x8xf32>, vector<8x16xf32>, vector<8x16xf32> -> vector<8x16xf32>
    %37 = vector.extract_strided_slice %1 {offsets = [1, 0, 0], sizes = [1, 8, 8], strides = [1, 1, 1]} : vector<3x8x8xf32> to vector<1x8x8xf32>
    %38 = vector.shape_cast %37 : vector<1x8x8xf32> to vector<8x8xf32>
    %cst_21 = arith.constant dense<0.000000e+00> : vector<8x16xf32>
    %39 = tpu.matmul %38, %25, %cst_21 {dimension_numbers = #tpu.dot_dimension_numbers<[1], [0], [0], [1], [0, 0, 1, 1], [], []>} : vector<8x8xf32>, vector<8x16xf32>, vector<8x16xf32> -> vector<8x16xf32>
    %40 = arith.addf %36, %39 : vector<8x16xf32>
    %41 = vector.extract_strided_slice %1 {offsets = [2, 0, 0], sizes = [1, 8, 8], strides = [1, 1, 1]} : vector<3x8x8xf32> to vector<1x8x8xf32>
    %42 = vector.shape_cast %41 : vector<1x8x8xf32> to vector<8x8xf32>
    %cst_22 = arith.constant dense<0.000000e+00> : vector<8x16xf32>
    %43 = tpu.matmul %42, %33, %cst_22 {dimension_numbers = #tpu.dot_dimension_numbers<[1], [0], [0], [1], [0, 0, 1, 1], [], []>} : vector<8x8xf32>, vector<8x16xf32>, vector<8x16xf32> -> vector<8x16xf32>
    %44 = arith.addf %40, %43 : vector<8x16xf32>
    %45 = vector.broadcast %3 : vector<8x1xf32> to vector<8x16xf32>
    %46 = arith.addf %44, %45 : vector<8x16xf32>
    %cst_23 = arith.constant 0.000000e+00 : f32
    %47 = vector.broadcast %cst_23 : f32 to vector<8x16xf32>
    %48 = arith.maximumf %46, %47 : vector<8x16xf32>
    %49 = vector.extract_strided_slice %48 {offsets = [0, 1], sizes = [8, 15], strides = [1, 1]} : vector<8x16xf32> to vector<8x15xf32>
    %50 = vector.extract_strided_slice %48 {offsets = [0, 0], sizes = [8, 1], strides = [1, 1]} : vector<8x16xf32> to vector<8x1xf32>
    %51 = tpu.concatenate %49, %50 in 1 : vector<8x15xf32>, vector<8x1xf32> -> vector<8x16xf32>
    %52 = arith.maximumf %48, %51 : vector<8x16xf32>
    %c0_24 = arith.constant 0 : index
    %c0_25 = arith.constant 0 : index
    %53 = vector.load %arg6[%c0_24, %c0_25] : memref<16x8xf32, #tpu.memory_space<vmem>>, vector<16x8xf32>
    %cst_26 = arith.constant dense<0.000000e+00> : vector<8x8xf32>
    %54 = tpu.matmul %52, %53, %cst_26 {dimension_numbers = #tpu.dot_dimension_numbers<[1], [0], [0], [1], [0, 0, 1, 1], [], []>} : vector<8x16xf32>, vector<16x8xf32>, vector<8x8xf32> -> vector<8x8xf32>
    %c0_27 = arith.constant 0 : index
    %c0_28 = arith.constant 0 : index
    %c0_29 = arith.constant 0 : index
    %55 = vector.load %arg7[%c0_27, %c0_28, %c0_29] : memref<1x8x8xf32, #tpu.memory_space<vmem>>, vector<1x8x8xf32>
    %56 = vector.shape_cast %55 : vector<1x8x8xf32> to vector<8x8xf32>
    %57 = vector.shape_cast %54 : vector<8x8xf32> to vector<1x8x8xf32>
    tpu.vector_store %arg7[%c0_27, %c0_28, %c0_29], %57 {strides = array<i32>} : memref<1x8x8xf32, #tpu.memory_space<vmem>>, vector<1x8x8xf32>,
    return
  }
  func.func @transform_0(%arg0: i32) -> (i32, i32, i32) {
    %c0_i32 = arith.constant 0 : i32
    %c0_i32_0 = arith.constant 0 : i32
    %c0_i32_1 = arith.constant 0 : i32
    return %arg0, %c0_i32, %c0_i32_0 : i32, i32, i32
  }
  func.func @transform_1(%arg0: i32) -> (i32, i32, i32) {
    %c0_i32 = arith.constant 0 : i32
    %c0_i32_0 = arith.constant 0 : i32
    %c0_i32_1 = arith.constant 0 : i32
    %c0_i32_2 = arith.constant 0 : i32
    return %c0_i32, %c0_i32_0, %c0_i32_1 : i32, i32, i32
  }
  func.func @transform_2(%arg0: i32) -> (i32, i32) {
    %c0_i32 = arith.constant 0 : i32
    %c0_i32_0 = arith.constant 0 : i32
    %c0_i32_1 = arith.constant 0 : i32
    return %c0_i32, %c0_i32_0 : i32, i32
  }
  func.func @transform_3(%arg0: i32) -> (i32, i32, i32) {
    %c0_i32 = arith.constant 0 : i32
    %c0_i32_0 = arith.constant 0 : i32
    %c0_i32_1 = arith.constant 0 : i32
    %c0_i32_2 = arith.constant 0 : i32
    return %c0_i32, %c0_i32_0, %c0_i32_1 : i32, i32, i32
  }
  func.func @transform_4(%arg0: i32) -> (i32, i32) {
    %c0_i32 = arith.constant 0 : i32
    %c0_i32_0 = arith.constant 0 : i32
    %c0_i32_1 = arith.constant 0 : i32
    return %c0_i32, %c0_i32_0 : i32, i32
  }
  func.func @transform_5(%arg0: i32) -> (i32, i32) {
    %c0_i32 = arith.constant 0 : i32
    %c0_i32_0 = arith.constant 0 : i32
    %c0_i32_1 = arith.constant 0 : i32
    return %c0_i32, %c0_i32_0 : i32, i32
  }
  func.func @transform_6(%arg0: i32) -> (i32, i32, i32) {
    %c0_i32 = arith.constant 0 : i32
    %c0_i32_0 = arith.constant 0 : i32
    %c0_i32_1 = arith.constant 0 : i32
    return %arg0, %c0_i32, %c0_i32_0 : i32, i32, i32
  }
  func.func @transform_7(%arg0: i32) -> (i32, i32, i32) {
    %c0_i32 = arith.constant 0 : i32
    %c0_i32_0 = arith.constant 0 : i32
    %c0_i32_1 = arith.constant 0 : i32
    return %arg0, %c0_i32, %c0_i32_0 : i32, i32, i32
  }
}

</mosaic_0001>

<llo_original>
// kernel: tpu_custom_call.1
$region0: #{tpu_custom_call.1}
  #allocation0 [shape = 'u32[]', space=smem, size = 0x4, offset = 0x4, fixed_abs, tag = 'smem constant byte address 0x4 - core index']
  #allocation1 [shape = 'u32[144,128]{1,0:T(1,128)}', space=vmem, size = 0x12000, scoped, tag = 'internal scratch']
  %s0 = inlined_call_operand.vmem [shape: f32[2,4,16], index: 0, kind: input, shape index: {}]
  %s1 = inlined_call_operand.vmem [shape: f32[3,8,4], index: 1, kind: input, shape index: {}]
  %s2 = inlined_call_operand.vmem [shape: f32[8,1], index: 2, kind: input, shape index: {}]
  %s3 = inlined_call_operand.vmem [shape: f32[3,8,8], index: 3, kind: input, shape index: {}]
  %s4 = inlined_call_operand.vmem [shape: f32[8,1], index: 4, kind: input, shape index: {}]
  %s5 = inlined_call_operand.vmem [shape: f32[16,8], index: 5, kind: input, shape index: {}]
  %s6 = inlined_call_operand.hbm [shape: f32[2,8,8], index: 6, kind: output, shape index: {0}]
  %s7 = inlined_call_operand.hbm [shape: f32[2,8,16], index: 7, kind: output, shape index: {1}]
  %8 = xla_tuple %s6, %s7
  %s9 = sld [smem:[#allocation0]]
  $region65: #{tpu_custom_call.1} parent=0
    _
  %s11 = ssub.s32 1, %s9
  %s12 = scalar_select 0, %s11, %s9
  $region1: #{tpu_custom_call.1} parent=0
    #allocation2 [shape = 'u8[8192]{0}', space=vmem, size = 0x2000, scoped, tag = 'output window, operand 0']
    #allocation3 [shape = 's32[2]{0}', space=sflag, size = 0x8, scoped, tag = 'scoped memory for tpu_custom_call.1']
    #allocation4 [shape = 'u8[8192]{0}', space=vmem, size = 0x2000, scoped, tag = 'output window, operand 1']
    #allocation5 [shape = 's32[2]{0}', space=sflag, size = 0x8, scoped, tag = 'scoped memory for tpu_custom_call.1']
    %13 = vsyncpa [#allocation3], 0
    %s14 = scalar_lea.sflag [#allocation3], 1
    %15 = vsyncpa %s14, 0
    %16 = vsyncpa [#allocation5], 0
    %s17 = scalar_lea.sflag [#allocation5], 1
    %18 = vsyncpa %s17, 0
    loop: start=0, step=1, limit=4
    $region2: #{tpu_custom_call.1} parent=1 // loop_pre_header
      _
    $region3: #{tpu_custom_call.1} parent=1 // loop_header
      %s20 = sphi 0, %s24
      %p21 = scmp.ge.s32.totalorder %s20, 4
      %s30 = sphi 0, %s32
      %s33 = sphi 0, %s30
      %s34 = sphi 0, %s33
      %s50 = sphi 0, %s34
      %s54 = sphi 0, %s54
      %s56 = sphi 0, %s54
      %s57 = sphi 0, %s56
      %s71 = sphi 0, %s57
      %s75 = sphi 0, %s75
      %s77 = sphi 0, %s75
      %s78 = sphi 0, %s77
      %s92 = sphi 0, %s78
      %s96 = sphi 0, %s96
      %s98 = sphi 0, %s96
      %s99 = sphi 0, %s98
      %s113 = sphi 0, %s99
      %s117 = sphi 0, %s117
      %s119 = sphi 0, %s117
      %s120 = sphi 0, %s119
      %s134 = sphi 0, %s120
      %s138 = sphi 0, %s138
      %s140 = sphi 0, %s138
      %s141 = sphi 0, %s140
      %s155 = sphi 0, %s141
      %s161 = sphi 0, %s163
      %s164 = sphi 0, %s161
      %s165 = sphi 0, %s164
      %s181 = sphi 0, %s165
      %s187 = sphi 0, %s189
      %s190 = sphi 0, %s187
      %s191 = sphi 0, %s190
      %s207 = sphi 0, %s191
    $region4: #{tpu_custom_call.1} parent=1 // loop_header_branch
      %23 = sbr.rel (%p21) target = $region8
    $region5: #{tpu_custom_call.1} parent=1 // loop_body
      %s25 = ssub.s32 %s20, 1
      %s26 = ssub.s32 %s20, 2
      %s27 = sadd.s32 %s20, 1
      %s28 = ssub.s32 %s20, %s27
      %p29 = scmp.eq.s32.totalorder %s28, 0
      %s31 = sadd.s32 %s30, 1
      %s32 = scalar_select %p29, %s30, %s31
      %p35 = pneg %p29
      %p36 = scmp.eq.s32.totalorder %s20, 1
      %p37 = por %p35, %p36
      %p38 = scmp.ne.s32.totalorder %s30, %s33
      %p39 = scmp.eq.s32.totalorder %s20, 0
      %p40 = por %p38, %p39
      %p41 = scmp.ne.s32.totalorder %s30, %s33
      %p42 = scmp.eq.s32.totalorder %s25, 1
      %p43 = por %p41, %p42
      %p44 = scmp.ne.s32.totalorder %s33, %s34
      %p45 = scmp.eq.s32.totalorder %s25, 0
      %p46 = por %p44, %p45
      %p47 = scmp.ne.s32.totalorder %s33, %s34
      %p48 = scmp.eq.s32.totalorder %s26, 1
      %p49 = por %p47, %p48
      %p51 = scmp.ne.s32.totalorder %s34, %s50
      %p52 = scmp.eq.s32.totalorder %s26, 0
      %p53 = por %p51, %p52
      %s55 = sadd.s32 %s54, 1
      %p58 = scmp.eq.s32.totalorder %s20, 1
      %p59 = scmp.ne.s32.totalorder %s54, %s56
      %p60 = scmp.eq.s32.totalorder %s20, 0
      %p61 = por %p59, %p60
      %p62 = scmp.ne.s32.totalorder %s54, %s56
      %p63 = scmp.eq.s32.totalorder %s25, 1
      %p64 = por %p62, %p63
      %p65 = scmp.ne.s32.totalorder %s56, %s57
      %p66 = scmp.eq.s32.totalorder %s25, 0
      %p67 = por %p65, %p66
      %p68 = scmp.ne.s32.totalorder %s56, %s57
      %p69 = scmp.eq.s32.totalorder %s26, 1
      %p70 = por %p68, %p69
      %p72 = scmp.ne.s32.totalorder %s57, %s71
      %p73 = scmp.eq.s32.totalorder %s26, 0
      %p74 = por %p72, %p73
      %s76 = sadd.s32 %s75, 1
      %p79 = scmp.eq.s32.totalorder %s20, 1
      %p80 = scmp.ne.s32.totalorder %s75, %s77
      %p81 = scmp.eq.s32.totalorder %s20, 0
      %p82 = por %p80, %p81
      %p83 = scmp.ne.s32.totalorder %s75, %s77
      %p84 = scmp.eq.s32.totalorder %s25, 1
      %p85 = por %p83, %p84
      %p86 = scmp.ne.s32.totalorder %s77, %s78
      %p87 = scmp.eq.s32.totalorder %s25, 0
      %p88 = por %p86, %p87
      %p89 = scmp.ne.s32.totalorder %s77, %s78
      %p90 = scmp.eq.s32.totalorder %s26, 1
      %p91 = por %p89, %p90
      %p93 = scmp.ne.s32.totalorder %s78, %s92
      %p94 = scmp.eq.s32.totalorder %s26, 0
      %p95 = por %p93, %p94
      %s97 = sadd.s32 %s96, 1
      %p100 = scmp.eq.s32.totalorder %s20, 1
      %p101 = scmp.ne.s32.totalorder %s96, %s98
      %p102 = scmp.eq.s32.totalorder %s20, 0
      %p103 = por %p101, %p102
      %p104 = scmp.ne.s32.totalorder %s96, %s98
      %p105 = scmp.eq.s32.totalorder %s25, 1
      %p106 = por %p104, %p105
      %p107 = scmp.ne.s32.totalorder %s98, %s99
      %p108 = scmp.eq.s32.totalorder %s25, 0
      %p109 = por %p107, %p108
      %p110 = scmp.ne.s32.totalorder %s98, %s99
      %p111 = scmp.eq.s32.totalorder %s26, 1
      %p112 = por %p110, %p111
      %p114 = scmp.ne.s32.totalorder %s99, %s113
      %p115 = scmp.eq.s32.totalorder %s26, 0
      %p116 = por %p114, %p115
      %s118 = sadd.s32 %s117, 1
      %p121 = scmp.eq.s32.totalorder %s20, 1
      %p122 = scmp.ne.s32.totalorder %s117, %s119
      %p123 = scmp.eq.s32.totalorder %s20, 0
      %p124 = por %p122, %p123
      %p125 = scmp.ne.s32.totalorder %s117, %s119
      %p126 = scmp.eq.s32.totalorder %s25, 1
      %p127 = por %p125, %p126
      %p128 = scmp.ne.s32.totalorder %s119, %s120
      %p129 = scmp.eq.s32.totalorder %s25, 0
      %p130 = por %p128, %p129
      %p131 = scmp.ne.s32.totalorder %s119, %s120
      %p132 = scmp.eq.s32.totalorder %s26, 1
      %p133 = por %p131, %p132
      %p135 = scmp.ne.s32.totalorder %s120, %s134
      %p136 = scmp.eq.s32.totalorder %s26, 0
      %p137 = por %p135, %p136
      %s139 = sadd.s32 %s138, 1
      %p142 = scmp.eq.s32.totalorder %s20, 1
      %p143 = scmp.ne.s32.totalorder %s138, %s140
      %p144 = scmp.eq.s32.totalorder %s20, 0
      %p145 = por %p143, %p144
      %p146 = scmp.ne.s32.totalorder %s138, %s140
      %p147 = scmp.eq.s32.totalorder %s25, 1
      %p148 = por %p146, %p147
      %p149 = scmp.ne.s32.totalorder %s140, %s141
      %p150 = scmp.eq.s32.totalorder %s25, 0
      %p151 = por %p149, %p150
      %p152 = scmp.ne.s32.totalorder %s140, %s141
      %p153 = scmp.eq.s32.totalorder %s26, 1
      %p154 = por %p152, %p153
      %p156 = scmp.ne.s32.totalorder %s141, %s155
      %p157 = scmp.eq.s32.totalorder %s26, 0
      %p158 = por %p156, %p157
      %s159 = ssub.s32 %s20, %s27
      %p160 = scmp.eq.s32.totalorder %s159, 0
      %s162 = sadd.s32 %s161, 1
      %s163 = scalar_select %p160, %s161, %s162
      %p166 = pneg %p160
      %p167 = scmp.eq.s32.totalorder %s20, 1
      %p168 = por %p166, %p167
      %p169 = scmp.ne.s32.totalorder %s161, %s164
      %p170 = scmp.eq.s32.totalorder %s20, 0
      %p171 = por %p169, %p170
      %p172 = scmp.ne.s32.totalorder %s161, %s164
      %p173 = scmp.eq.s32.totalorder %s25, 1
      %p174 = por %p172, %p173
      %p175 = scmp.ne.s32.totalorder %s164, %s165
      %p176 = scmp.eq.s32.totalorder %s25, 0
      %p177 = por %p175, %p176
      %p178 = scmp.ne.s32.totalorder %s164, %s165
      %p179 = scmp.eq.s32.totalorder %s26, 1
      %p180 = por %p178, %p179
      %p182 = scmp.ne.s32.totalorder %s165, %s181
      %p183 = scmp.eq.s32.totalorder %s26, 0
      %p184 = por %p182, %p183
      %s185 = ssub.s32 %s20, %s27
      %p186 = scmp.eq.s32.totalorder %s185, 0
      %s188 = sadd.s32 %s187, 1
      %s189 = scalar_select %p186, %s187, %s188
      %p192 = pneg %p186
      %p193 = scmp.eq.s32.totalorder %s20, 1
      %p194 = por %p192, %p193
      %p195 = scmp.ne.s32.totalorder %s187, %s190
      %p196 = scmp.eq.s32.totalorder %s20, 0
      %p197 = por %p195, %p196
      %p198 = scmp.ne.s32.totalorder %s187, %s190
      %p199 = scmp.eq.s32.totalorder %s25, 1
      %p200 = por %p198, %p199
      %p201 = scmp.ne.s32.totalorder %s190, %s191
      %p202 = scmp.eq.s32.totalorder %s25, 0
      %p203 = por %p201, %p202
      %p204 = scmp.ne.s32.totalorder %s190, %s191
      %p205 = scmp.eq.s32.totalorder %s26, 1
      %p206 = por %p204, %p205
      %p208 = scmp.ne.s32.totalorder %s191, %s207
      %p209 = scmp.eq.s32.totalorder %s26, 0
      %p210 = por %p208, %p209
      %p211 = scmp.le.s32.totalorder 1, %s20
      %p212 = scmp.lt.s32.totalorder %s20, 3
      %p213 = pnand %p211, %p212
      %p214 = pneg %p213
      // Predicated region
      $region9: #{tpu_custom_call.1} parent=5 // pred_check
        _
      $region10: #{tpu_custom_call.1} parent=5 // pred_check_branch
        %216 = sbr.rel (%p213) target = $region12
      $region11: #{tpu_custom_call.1} parent=5 // pred_region
        %s217 = ssub.s32 %s20, 1
        // Predicated region
        $region13: #{tpu_custom_call.1} parent=11 // pred_check
          %p218 = pneg %p67
        $region14: #{tpu_custom_call.1} parent=11 // pred_check_branch
          %220 = sbr.rel (%p218) target = $region16
        $region15: #{tpu_custom_call.1} parent=11 // pred_region
          _
        $region16: #{tpu_custom_call.1} parent=11 // pred_fallthru
          _
        // Predicated region
        $region17: #{tpu_custom_call.1} parent=11 // pred_check
          %p221 = pneg %p88
        $region18: #{tpu_custom_call.1} parent=11 // pred_check_branch
          %223 = sbr.rel (%p221) target = $region20
        $region19: #{tpu_custom_call.1} parent=11 // pred_region
          _
        $region20: #{tpu_custom_call.1} parent=11 // pred_fallthru
          _
        // Predicated region
        $region21: #{tpu_custom_call.1} parent=11 // pred_check
          %p224 = pneg %p109
        $region22: #{tpu_custom_call.1} parent=11 // pred_check_branch
          %226 = sbr.rel (%p224) target = $region24
        $region23: #{tpu_custom_call.1} parent=11 // pred_region
          _
        $region24: #{tpu_custom_call.1} parent=11 // pred_fallthru
          _
        // Predicated region
        $region25: #{tpu_custom_call.1} parent=11 // pred_check
          %p227 = pneg %p130
        $region26: #{tpu_custom_call.1} parent=11 // pred_check_branch
          %229 = sbr.rel (%p227) target = $region28
        $region27: #{tpu_custom_call.1} parent=11 // pred_region
          _
        $region28: #{tpu_custom_call.1} parent=11 // pred_fallthru
          _
        // Predicated region
        $region29: #{tpu_custom_call.1} parent=11 // pred_check
          %p230 = pneg %p151
        $region30: #{tpu_custom_call.1} parent=11 // pred_check_branch
          %232 = sbr.rel (%p230) target = $region32
        $region31: #{tpu_custom_call.1} parent=11 // pred_region
          _
        $region32: #{tpu_custom_call.1} parent=11 // pred_fallthru
          _
      $region12: #{tpu_custom_call.1} parent=5 // pred_fallthru
        _
      %p233 = scmp.lt.s32.totalorder %s20, 2
      // Predicated region
      $region33: #{tpu_custom_call.1} parent=5 // pred_check
        %p234 = pneg %p233
      $region34: #{tpu_custom_call.1} parent=5 // pred_check_branch
        %236 = sbr.rel (%p234) target = $region36
      $region35: #{tpu_custom_call.1} parent=5 // pred_region
        // Predicated region
        $region37: #{tpu_custom_call.1} parent=35 // pred_check
          %p237 = pneg %p40
        $region38: #{tpu_custom_call.1} parent=35 // pred_check_branch
          %239 = sbr.rel (%p237) target = $region40
        $region39: #{tpu_custom_call.1} parent=35 // pred_region
          %p240 = scmp.lt.s32.totalorder %s20, 1
          %s241 = scalar_select %p240, %s20, 1
          %s242 = smul.addr %s241, 4
          %s243 = scalar_lea.vmem %s0, %s242
        $region40: #{tpu_custom_call.1} parent=35 // pred_fallthru
          _
      $region36: #{tpu_custom_call.1} parent=5 // pred_fallthru
        _
      %p244 = scmp.le.s32.totalorder 1, %s20
      %p245 = scmp.lt.s32.totalorder %s20, 3
      %p246 = pnand %p244, %p245
      %p247 = pneg %p246
      // Predicated region
      $region41: #{tpu_custom_call.1} parent=5 // pred_check
        _
      $region42: #{tpu_custom_call.1} parent=5 // pred_check_branch
        %249 = sbr.rel (%p246) target = $region44
      $region43: #{tpu_custom_call.1} parent=5 // pred_region
        %s250 = ssub.s32 %s20, 1
        %p251 = scmp.lt.s32.totalorder %s25, 1
        %s252 = scalar_select %p251, %s25, 1
        %s253 = smul.addr %s252, 4
        %s254 = scalar_lea.vmem %s0, %s253
        %p255 = pneg %p46
        %p256 = pneg %p43
        %p257 = pneg %p67
        %p258 = pneg %p64
        %p259 = pneg %p88
        %p260 = pneg %p85
        %p261 = pneg %p109
        %p262 = pneg %p106
        %p263 = pneg %p130
        %p264 = pneg %p127
        %p265 = pneg %p151
        %p266 = pneg %p148
        %p267 = pneg %p177
        %p268 = pneg %p174
        %s269 = sand.u32 %s164, 1
        %s270 = scalar_lea.sflag [#allocation3], %s269
        %s271 = sand.u32 %s164, 1
        %s272 = smul.addr %s271, 8
        %s273 = scalar_lea.vmem [#allocation2], %s272
        %p274 = pneg %p203
        %p275 = pneg %p200
        %s276 = sand.u32 %s190, 1
        %s277 = scalar_lea.sflag [#allocation5], %s276
        %s278 = sand.u32 %s190, 1
        %s279 = smul.addr %s278, 8
        %s280 = scalar_lea.vmem [#allocation4], %s279
        %p281 = scmp.lt.s32.totalorder %s25, 1
        %s282 = scalar_select %p281, %s25, 1
        %s283 = smul.addr %s282, 4
        %s284 = scalar_lea.vmem %s0, %s283
        %v285 = vld [vmem:[%s1] sm:$0xff]
        %v286 = vld [vmem:[%s1 + $0x8] sm:$0xff]
        %v287 = vld [vmem:[%s1 + $0x10] sm:$0xff]
        %v288 = vld [vmem:[%s3] sm:$0xff]
        %v289 = vld [vmem:[%s3 + $0x8] sm:$0xff]
        %v290 = vld [vmem:[%s3 + $0x10] sm:$0xff]
        %v291 = vld [vmem:[%s2] sm:$0xff]
        %v292 = vld [vmem:[%s4] sm:$0xff]
        %v293 = vld [vmem:[%s284] sm:$0xf]
        %295 = vrot.lane.b32.xlu0 %v293, 1
        %v296 = vpop.permute.xlu0 %295
        %vm298 = vcmask 7168
        %v299 = vsel %vm298, 0.0, %v296
        %300 = vrot.lane.b32.xlu0 %v293, 127
        %v301 = vpop.permute.xlu0 %300
        %vm303 = vcmask 121856
        %v304 = vsel %vm303, %v301, 0.0
        %vm305 = vcmask 31744
        %v307 = vsel %vm305, %v286, 0
        %vm309 = vcmask 1043456
        %v310 = vsel %vm309, %v293, 0
        %312 = vmatprep.subr.mxu0 0.0
        %313 = vmatpush1.msra.mxu0 %v310
        %314 = vmatprep.subr.mxu0 0.0
        %315 = vmatpush1.msra.mxu0 0.0
        %316 = vmatprep.subr.mxu0 0.0
        %317 = vmatpush1.msra.mxu0 0.0
        %318 = vmatprep.subr.mxu0 0.0
        %319 = vmatpush1.msra.mxu0 0.0
        %320 = vmatprep.subr.mxu0 0.0
        %321 = vmatpush1.msra.mxu0 0.0
        %322 = vmatprep.subr.mxu0 0.0
        %323 = vmatpush1.msra.mxu0 0.0
        %324 = vmatprep.subr.mxu0 0.0
        %325 = vmatpush1.msra.mxu0 0.0
        %326 = vmatprep.subr.mxu0 0.0
        %327 = vmatpush1.msra.mxu0 0.0
        %328 = vmatprep.subr.mxu0 0.0
        %329 = vmatpush1.msra.mxu0 0.0
        %330 = vmatprep.subr.mxu0 0.0
        %331 = vmatpush1.msra.mxu0 0.0
        %332 = vmatprep.subr.mxu0 0.0
        %333 = vmatpush1.msra.mxu0 0.0
        %334 = vmatprep.subr.mxu0 0.0
        %335 = vmatpush1.msra.mxu0 0.0
        %336 = vmatprep.subr.mxu0 0.0
        %337 = vmatpush1.msra.mxu0 0.0
        %338 = vmatprep.subr.mxu0 0.0
        %339 = vmatpush1.msra.mxu0 0.0
        %340 = vmatprep.subr.mxu0 0.0
        %341 = vmatpush1.msra.mxu0 0.0
        %342 = vmatprep.subr.mxu0 0.0
        %343 = vmatpush1.msra.mxu0 0.0
        %344 = vmatprep.subr.mxu0 0.0
        %345 = vmatpush1.msra.mxu0 0.0
        %346 = vmatprep.subr.mxu0 0.0
        %347 = vmatpush1.msra.mxu0 0.0
        %348 = vmatprep.subr.mxu0 0.0
        %349 = vmatpush1.msra.mxu0 0.0
        %350 = vmatprep.subr.mxu0 0.0
        %351 = vmatpush1.msra.mxu0 0.0
        %352 = vmatprep.subr.mxu0 0.0
        %353 = vmatpush1.msra.mxu0 0.0
        %354 = vmatprep.subr.mxu0 0.0
        %355 = vmatpush1.msra.mxu0 0.0
        %356 = vmatprep.subr.mxu0 0.0
        %357 = vmatpush1.msra.mxu0 0.0
        %358 = vmatprep.subr.mxu0 0.0
        %359 = vmatpush1.msra.mxu0 0.0
        %360 = vmatprep.subr.mxu0 0.0
        %361 = vmatpush1.msra.mxu0 0.0
        %362 = vmatprep.subr.mxu0 0.0
        %363 = vmatpush1.msra.mxu0 0.0
        %364 = vmatprep.subr.mxu0 0.0
        %365 = vmatpush1.msra.mxu0 0.0
        %366 = vmatprep.subr.mxu0 0.0
        %367 = vmatpush1.msra.mxu0 0.0
        %368 = vmatprep.subr.mxu0 0.0
        %369 = vmatpush1.msra.mxu0 0.0
        %370 = vmatprep.subr.mxu0 0.0
        %371 = vmatpush1.msra.mxu0 0.0
        %372 = vmatprep.subr.mxu0 0.0
        %373 = vmatpush1.msra.mxu0 0.0
        %374 = vmatprep.subr.mxu0 0.0
        %375 = vmatpush1.msra.mxu0 0.0
        %376 = vmatprep.mubr.f32.mxu0 0.0
        %377 = vmatmul.mubr.f32.gmra.mrb[0].mxu0 %v307
        %v378 = vpop.f32.mrb[0].mxu0
        %v379 = vadd.f32 0.0, %v378
        %v380 = vpop.f32.mrb[0].mxu0
        %381 = vdwg.mxu0
        %v383 = vsel %vm305, %v285, 0
        %v386 = vsel %vm309, %v299, 0
        %388 = vmatprep.subr.mxu0 0.0
        %389 = vmatpush1.msra.mxu0 %v386
        %390 = vmatprep.subr.mxu0 0.0
        %391 = vmatpush1.msra.mxu0 0.0
        %392 = vmatprep.subr.mxu0 0.0
        %393 = vmatpush1.msra.mxu0 0.0
        %394 = vmatprep.subr.mxu0 0.0
        %395 = vmatpush1.msra.mxu0 0.0
        %396 = vmatprep.subr.mxu0 0.0
        %397 = vmatpush1.msra.mxu0 0.0
        %398 = vmatprep.subr.mxu0 0.0
        %399 = vmatpush1.msra.mxu0 0.0
        %400 = vmatprep.subr.mxu0 0.0
        %401 = vmatpush1.msra.mxu0 0.0
        %402 = vmatprep.subr.mxu0 0.0
        %403 = vmatpush1.msra.mxu0 0.0
        %404 = vmatprep.subr.mxu0 0.0
        %405 = vmatpush1.msra.mxu0 0.0
        %406 = vmatprep.subr.mxu0 0.0
        %407 = vmatpush1.msra.mxu0 0.0
        %408 = vmatprep.subr.mxu0 0.0
        %409 = vmatpush1.msra.mxu0 0.0
        %410 = vmatprep.subr.mxu0 0.0
        %411 = vmatpush1.msra.mxu0 0.0
        %412 = vmatprep.subr.mxu0 0.0
        %413 = vmatpush1.msra.mxu0 0.0
        %414 = vmatprep.subr.mxu0 0.0
        %415 = vmatpush1.msra.mxu0 0.0
        %416 = vmatprep.subr.mxu0 0.0
        %417 = vmatpush1.msra.mxu0 0.0
        %418 = vmatprep.subr.mxu0 0.0
        %419 = vmatpush1.msra.mxu0 0.0
        %420 = vmatprep.subr.mxu0 0.0
        %421 = vmatpush1.msra.mxu0 0.0
        %422 = vmatprep.subr.mxu0 0.0
        %423 = vmatpush1.msra.mxu0 0.0
        %424 = vmatprep.subr.mxu0 0.0
        %425 = vmatpush1.msra.mxu0 0.0
        %426 = vmatprep.subr.mxu0 0.0
        %427 = vmatpush1.msra.mxu0 0.0
        %428 = vmatprep.subr.mxu0 0.0
        %429 = vmatpush1.msra.mxu0 0.0
        %430 = vmatprep.subr.mxu0 0.0
        %431 = vmatpush1.msra.mxu0 0.0
        %432 = vmatprep.subr.mxu0 0.0
        %433 = vmatpush1.msra.mxu0 0.0
        %434 = vmatprep.subr.mxu0 0.0
        %435 = vmatpush1.msra.mxu0 0.0
        %436 = vmatprep.subr.mxu0 0.0
        %437 = vmatpush1.msra.mxu0 0.0
        %438 = vmatprep.subr.mxu0 0.0
        %439 = vmatpush1.msra.mxu0 0.0
        %440 = vmatprep.subr.mxu0 0.0
        %441 = vmatpush1.msra.mxu0 0.0
        %442 = vmatprep.subr.mxu0 0.0
        %443 = vmatpush1.msra.mxu0 0.0
        %444 = vmatprep.subr.mxu0 0.0
        %445 = vmatpush1.msra.mxu0 0.0
        %446 = vmatprep.subr.mxu0 0.0
        %447 = vmatpush1.msra.mxu0 0.0
        %448 = vmatprep.subr.mxu0 0.0
        %449 = vmatpush1.msra.mxu0 0.0
        %450 = vmatprep.subr.mxu0 0.0
        %451 = vmatpush1.msra.mxu0 0.0
        %452 = vmatprep.mubr.f32.mxu0 0.0
        %453 = vmatmul.mubr.f32.gmra.mrb[0].mxu0 %v383
        %v454 = vpop.f32.mrb[0].mxu0
        %v455 = vadd.f32 %v379, %v454
        %v456 = vpop.f32.mrb[0].mxu0
        %457 = vdwg.mxu0
        %v459 = vsel %vm305, %v287, 0
        %v462 = vsel %vm309, %v304, 0
        %464 = vmatprep.subr.mxu0 0.0
        %465 = vmatpush1.msra.mxu0 %v462
        %466 = vmatprep.subr.mxu0 0.0
        %467 = vmatpush1.msra.mxu0 0.0
        %468 = vmatprep.subr.mxu0 0.0
        %469 = vmatpush1.msra.mxu0 0.0
        %470 = vmatprep.subr.mxu0 0.0
        %471 = vmatpush1.msra.mxu0 0.0
        %472 = vmatprep.subr.mxu0 0.0
        %473 = vmatpush1.msra.mxu0 0.0
        %474 = vmatprep.subr.mxu0 0.0
        %475 = vmatpush1.msra.mxu0 0.0
        %476 = vmatprep.subr.mxu0 0.0
        %477 = vmatpush1.msra.mxu0 0.0
        %478 = vmatprep.subr.mxu0 0.0
        %479 = vmatpush1.msra.mxu0 0.0
        %480 = vmatprep.subr.mxu0 0.0
        %481 = vmatpush1.msra.mxu0 0.0
        %482 = vmatprep.subr.mxu0 0.0
        %483 = vmatpush1.msra.mxu0 0.0
        %484 = vmatprep.subr.mxu0 0.0
        %485 = vmatpush1.msra.mxu0 0.0
        %486 = vmatprep.subr.mxu0 0.0
        %487 = vmatpush1.msra.mxu0 0.0
        %488 = vmatprep.subr.mxu0 0.0
        %489 = vmatpush1.msra.mxu0 0.0
        %490 = vmatprep.subr.mxu0 0.0
        %491 = vmatpush1.msra.mxu0 0.0
        %492 = vmatprep.subr.mxu0 0.0
        %493 = vmatpush1.msra.mxu0 0.0
        %494 = vmatprep.subr.mxu0 0.0
        %495 = vmatpush1.msra.mxu0 0.0
        %496 = vmatprep.subr.mxu0 0.0
        %497 = vmatpush1.msra.mxu0 0.0
        %498 = vmatprep.subr.mxu0 0.0
        %499 = vmatpush1.msra.mxu0 0.0
        %500 = vmatprep.subr.mxu0 0.0
        %501 = vmatpush1.msra.mxu0 0.0
        %502 = vmatprep.subr.mxu0 0.0
        %503 = vmatpush1.msra.mxu0 0.0
        %504 = vmatprep.subr.mxu0 0.0
        %505 = vmatpush1.msra.mxu0 0.0
        %506 = vmatprep.subr.mxu0 0.0
        %507 = vmatpush1.msra.mxu0 0.0
        %508 = vmatprep.subr.mxu0 0.0
        %509 = vmatpush1.msra.mxu0 0.0
        %510 = vmatprep.subr.mxu0 0.0
        %511 = vmatpush1.msra.mxu0 0.0
        %512 = vmatprep.subr.mxu0 0.0
        %513 = vmatpush1.msra.mxu0 0.0
        %514 = vmatprep.subr.mxu0 0.0
        %515 = vmatpush1.msra.mxu0 0.0
        %516 = vmatprep.subr.mxu0 0.0
        %517 = vmatpush1.msra.mxu0 0.0
        %518 = vmatprep.subr.mxu0 0.0
        %519 = vmatpush1.msra.mxu0 0.0
        %520 = vmatprep.subr.mxu0 0.0
        %521 = vmatpush1.msra.mxu0 0.0
        %522 = vmatprep.subr.mxu0 0.0
        %523 = vmatpush1.msra.mxu0 0.0
        %524 = vmatprep.subr.mxu0 0.0
        %525 = vmatpush1.msra.mxu0 0.0
        %526 = vmatprep.subr.mxu0 0.0
        %527 = vmatpush1.msra.mxu0 0.0
        %528 = vmatprep.mubr.f32.mxu0 0.0
        %529 = vmatmul.mubr.f32.gmra.mrb[0].mxu0 %v459
        %v530 = vpop.f32.mrb[0].mxu0
        %v531 = vadd.f32 0.0, %v530
        %v532 = vpop.f32.mrb[0].mxu0
        %533 = vdwg.mxu0
        %v534 = vadd.f32 %v455, %v531
        %536 = vset.pattern.permute.xlu0 0
        %537 = vperm.xlu0 %536, %v291
        %v538 = vpop.permute.xlu0 %537
        %v540 = vadd.f32 %v534, %v538
        %v541 = vmax.f32 %v540, 0.0
        %vm542 = vcmask 130048
        %543 = vst.msk [vmem:[%s280] sm:$0xff] %vm542, %v541
        %545 = vrot.lane.b32.xlu0 %v541, 1
        %v546 = vpop.permute.xlu0 %545
        %v548 = vsel %vm298, 0.0, %v546
        %549 = vrot.lane.b32.xlu0 %v541, 127
        %v550 = vpop.permute.xlu0 %549
        %v552 = vsel %vm303, %v550, 0.0
        %vm553 = vcmask 64512
        %v555 = vsel %vm553, %v289, 0
        %557 = vmatprep.subr.mxu0 0.0
        %558 = vmatpush1.msra.mxu0 %v541
        %559 = vmatprep.subr.mxu0 0.0
        %560 = vmatpush1.msra.mxu0 0.0
        %561 = vmatprep.subr.mxu0 0.0
        %562 = vmatpush1.msra.mxu0 0.0
        %563 = vmatprep.subr.mxu0 0.0
        %564 = vmatpush1.msra.mxu0 0.0
        %565 = vmatprep.subr.mxu0 0.0
        %566 = vmatpush1.msra.mxu0 0.0
        %567 = vmatprep.subr.mxu0 0.0
        %568 = vmatpush1.msra.mxu0 0.0
        %569 = vmatprep.subr.mxu0 0.0
        %570 = vmatpush1.msra.mxu0 0.0
        %571 = vmatprep.subr.mxu0 0.0
        %572 = vmatpush1.msra.mxu0 0.0
        %573 = vmatprep.subr.mxu0 0.0
        %574 = vmatpush1.msra.mxu0 0.0
        %575 = vmatprep.subr.mxu0 0.0
        %576 = vmatpush1.msra.mxu0 0.0
        %577 = vmatprep.subr.mxu0 0.0
        %578 = vmatpush1.msra.mxu0 0.0
        %579 = vmatprep.subr.mxu0 0.0
        %580 = vmatpush1.msra.mxu0 0.0
        %581 = vmatprep.subr.mxu0 0.0
        %582 = vmatpush1.msra.mxu0 0.0
        %583 = vmatprep.subr.mxu0 0.0
        %584 = vmatpush1.msra.mxu0 0.0
        %585 = vmatprep.subr.mxu0 0.0
        %586 = vmatpush1.msra.mxu0 0.0
        %587 = vmatprep.subr.mxu0 0.0
        %588 = vmatpush1.msra.mxu0 0.0
        %589 = vmatprep.subr.mxu0 0.0
        %590 = vmatpush1.msra.mxu0 0.0
        %591 = vmatprep.subr.mxu0 0.0
        %592 = vmatpush1.msra.mxu0 0.0
        %593 = vmatprep.subr.mxu0 0.0
        %594 = vmatpush1.msra.mxu0 0.0
        %595 = vmatprep.subr.mxu0 0.0
        %596 = vmatpush1.msra.mxu0 0.0
        %597 = vmatprep.subr.mxu0 0.0
        %598 = vmatpush1.msra.mxu0 0.0
        %599 = vmatprep.subr.mxu0 0.0
        %600 = vmatpush1.msra.mxu0 0.0
        %601 = vmatprep.subr.mxu0 0.0
        %602 = vmatpush1.msra.mxu0 0.0
        %603 = vmatprep.subr.mxu0 0.0
        %604 = vmatpush1.msra.mxu0 0.0
        %605 = vmatprep.subr.mxu0 0.0
        %606 = vmatpush1.msra.mxu0 0.0
        %607 = vmatprep.subr.mxu0 0.0
        %608 = vmatpush1.msra.mxu0 0.0
        %609 = vmatprep.subr.mxu0 0.0
        %610 = vmatpush1.msra.mxu0 0.0
        %611 = vmatprep.subr.mxu0 0.0
        %612 = vmatpush1.msra.mxu0 0.0
        %613 = vmatprep.subr.mxu0 0.0
        %614 = vmatpush1.msra.mxu0 0.0
        %615 = vmatprep.subr.mxu0 0.0
        %616 = vmatpush1.msra.mxu0 0.0
        %617 = vmatprep.subr.mxu0 0.0
        %618 = vmatpush1.msra.mxu0 0.0
        %619 = vmatprep.subr.mxu0 0.0
        %620 = vmatpush1.msra.mxu0 0.0
        %621 = vmatprep.mubr.f32.mxu0 0.0
        %622 = vmatmul.mubr.f32.gmra.mrb[0].mxu0 %v555
        %v623 = vpop.f32.mrb[0].mxu0
        %v624 = vadd.f32 0.0, %v623
        %v625 = vpop.f32.mrb[0].mxu0
        %626 = vdwg.mxu0
        %v628 = vsel %vm553, %v288, 0
        %630 = vmatprep.subr.mxu0 0.0
        %631 = vmatpush1.msra.mxu0 %v548
        %632 = vmatprep.subr.mxu0 0.0
        %633 = vmatpush1.msra.mxu0 0.0
        %634 = vmatprep.subr.mxu0 0.0
        %635 = vmatpush1.msra.mxu0 0.0
        %636 = vmatprep.subr.mxu0 0.0
        %637 = vmatpush1.msra.mxu0 0.0
        %638 = vmatprep.subr.mxu0 0.0
        %639 = vmatpush1.msra.mxu0 0.0
        %640 = vmatprep.subr.mxu0 0.0
        %641 = vmatpush1.msra.mxu0 0.0
        %642 = vmatprep.subr.mxu0 0.0
        %643 = vmatpush1.msra.mxu0 0.0
        %644 = vmatprep.subr.mxu0 0.0
        %645 = vmatpush1.msra.mxu0 0.0
        %646 = vmatprep.subr.mxu0 0.0
        %647 = vmatpush1.msra.mxu0 0.0
        %648 = vmatprep.subr.mxu0 0.0
        %649 = vmatpush1.msra.mxu0 0.0
        %650 = vmatprep.subr.mxu0 0.0
        %651 = vmatpush1.msra.mxu0 0.0
        %652 = vmatprep.subr.mxu0 0.0
        %653 = vmatpush1.msra.mxu0 0.0
        %654 = vmatprep.subr.mxu0 0.0
        %655 = vmatpush1.msra.mxu0 0.0
        %656 = vmatprep.subr.mxu0 0.0
        %657 = vmatpush1.msra.mxu0 0.0
        %658 = vmatprep.subr.mxu0 0.0
        %659 = vmatpush1.msra.mxu0 0.0
        %660 = vmatprep.subr.mxu0 0.0
        %661 = vmatpush1.msra.mxu0 0.0
        %662 = vmatprep.subr.mxu0 0.0
        %663 = vmatpush1.msra.mxu0 0.0
        %664 = vmatprep.subr.mxu0 0.0
        %665 = vmatpush1.msra.mxu0 0.0
        %666 = vmatprep.subr.mxu0 0.0
        %667 = vmatpush1.msra.mxu0 0.0
        %668 = vmatprep.subr.mxu0 0.0
        %669 = vmatpush1.msra.mxu0 0.0
        %670 = vmatprep.subr.mxu0 0.0
        %671 = vmatpush1.msra.mxu0 0.0
        %672 = vmatprep.subr.mxu0 0.0
        %673 = vmatpush1.msra.mxu0 0.0
        %674 = vmatprep.subr.mxu0 0.0
        %675 = vmatpush1.msra.mxu0 0.0
        %676 = vmatprep.subr.mxu0 0.0
        %677 = vmatpush1.msra.mxu0 0.0
        %678 = vmatprep.subr.mxu0 0.0
        %679 = vmatpush1.msra.mxu0 0.0
        %680 = vmatprep.subr.mxu0 0.0
        %681 = vmatpush1.msra.mxu0 0.0
        %682 = vmatprep.subr.mxu0 0.0
        %683 = vmatpush1.msra.mxu0 0.0
        %684 = vmatprep.subr.mxu0 0.0
        %685 = vmatpush1.msra.mxu0 0.0
        %686 = vmatprep.subr.mxu0 0.0
        %687 = vmatpush1.msra.mxu0 0.0
        %688 = vmatprep.subr.mxu0 0.0
        %689 = vmatpush1.msra.mxu0 0.0
        %690 = vmatprep.subr.mxu0 0.0
        %691 = vmatpush1.msra.mxu0 0.0
        %692 = vmatprep.subr.mxu0 0.0
        %693 = vmatpush1.msra.mxu0 0.0
        %694 = vmatprep.mubr.f32.mxu0 0.0
        %695 = vmatmul.mubr.f32.gmra.mrb[0].mxu0 %v628
        %v696 = vpop.f32.mrb[0].mxu0
        %v697 = vadd.f32 %v624, %v696
        %v698 = vpop.f32.mrb[0].mxu0
        %699 = vdwg.mxu0
        %v701 = vsel %vm553, %v290, 0
        %703 = vmatprep.subr.mxu0 0.0
        %704 = vmatpush1.msra.mxu0 %v552
        %705 = vmatprep.subr.mxu0 0.0
        %706 = vmatpush1.msra.mxu0 0.0
        %707 = vmatprep.subr.mxu0 0.0
        %708 = vmatpush1.msra.mxu0 0.0
        %709 = vmatprep.subr.mxu0 0.0
        %710 = vmatpush1.msra.mxu0 0.0
        %711 = vmatprep.subr.mxu0 0.0
        %712 = vmatpush1.msra.mxu0 0.0
        %713 = vmatprep.subr.mxu0 0.0
        %714 = vmatpush1.msra.mxu0 0.0
        %715 = vmatprep.subr.mxu0 0.0
        %716 = vmatpush1.msra.mxu0 0.0
        %717 = vmatprep.subr.mxu0 0.0
        %718 = vmatpush1.msra.mxu0 0.0
        %719 = vmatprep.subr.mxu0 0.0
        %720 = vmatpush1.msra.mxu0 0.0
        %721 = vmatprep.subr.mxu0 0.0
        %722 = vmatpush1.msra.mxu0 0.0
        %723 = vmatprep.subr.mxu0 0.0
        %724 = vmatpush1.msra.mxu0 0.0
        %725 = vmatprep.subr.mxu0 0.0
        %726 = vmatpush1.msra.mxu0 0.0
        %727 = vmatprep.subr.mxu0 0.0
        %728 = vmatpush1.msra.mxu0 0.0
        %729 = vmatprep.subr.mxu0 0.0
        %730 = vmatpush1.msra.mxu0 0.0
        %731 = vmatprep.subr.mxu0 0.0
        %732 = vmatpush1.msra.mxu0 0.0
        %733 = vmatprep.subr.mxu0 0.0
        %734 = vmatpush1.msra.mxu0 0.0
        %735 = vmatprep.subr.mxu0 0.0
        %736 = vmatpush1.msra.mxu0 0.0
        %737 = vmatprep.subr.mxu0 0.0
        %738 = vmatpush1.msra.mxu0 0.0
        %739 = vmatprep.subr.mxu0 0.0
        %740 = vmatpush1.msra.mxu0 0.0
        %741 = vmatprep.subr.mxu0 0.0
        %742 = vmatpush1.msra.mxu0 0.0
        %743 = vmatprep.subr.mxu0 0.0
        %744 = vmatpush1.msra.mxu0 0.0
        %745 = vmatprep.subr.mxu0 0.0
        %746 = vmatpush1.msra.mxu0 0.0
        %747 = vmatprep.subr.mxu0 0.0
        %748 = vmatpush1.msra.mxu0 0.0
        %749 = vmatprep.subr.mxu0 0.0
        %750 = vmatpush1.msra.mxu0 0.0
        %751 = vmatprep.subr.mxu0 0.0
        %752 = vmatpush1.msra.mxu0 0.0
        %753 = vmatprep.subr.mxu0 0.0
        %754 = vmatpush1.msra.mxu0 0.0
        %755 = vmatprep.subr.mxu0 0.0
        %756 = vmatpush1.msra.mxu0 0.0
        %757 = vmatprep.subr.mxu0 0.0
        %758 = vmatpush1.msra.mxu0 0.0
        %759 = vmatprep.subr.mxu0 0.0
        %760 = vmatpush1.msra.mxu0 0.0
        %761 = vmatprep.subr.mxu0 0.0
        %762 = vmatpush1.msra.mxu0 0.0
        %763 = vmatprep.subr.mxu0 0.0
        %764 = vmatpush1.msra.mxu0 0.0
        %765 = vmatprep.subr.mxu0 0.0
        %766 = vmatpush1.msra.mxu0 0.0
        %767 = vmatprep.mubr.f32.mxu0 0.0
        %768 = vmatmul.mubr.f32.gmra.mrb[0].mxu0 %v701
        %v769 = vpop.f32.mrb[0].mxu0
        %v770 = vadd.f32 0.0, %v769
        %v771 = vpop.f32.mrb[0].mxu0
        %772 = vdwg.mxu0
        %v773 = vadd.f32 %v697, %v770
        %775 = vset.pattern.permute.xlu0 0
        %776 = vperm.xlu0 %775, %v292
        %v777 = vpop.permute.xlu0 %776
        %v779 = vadd.f32 %v773, %v777
        %v780 = vmax.f32 %v779, 0.0
        %782 = vrot.lane.b32.xlu0 %v780, 127
        %v783 = vpop.permute.xlu0 %782
        %785 = vrot.lane.b32.xlu0 %v780, 15
        %v786 = vpop.permute.xlu0 %785
        %v788 = vsel %vm303, %v783, %v786
        %v789 = vmax.f32 %v780, %v788
        %v790 = vld [vmem:[%s5] sm:$0xff]
        %v791 = vld [vmem:[%s5 + $0x8] sm:$0xff]
        %v793 = vsel %vm542, %v789, 0
        %795 = vmatprep.subr.mxu0 0.0
        %796 = vmatpush1.msra.mxu0 %v790
        %797 = vmatprep.subr.mxu0 0.0
        %798 = vmatpush1.msra.mxu0 %v791
        %799 = vmatprep.subr.mxu0 0.0
        %800 = vmatpush1.msra.mxu0 0.0
        %801 = vmatprep.subr.mxu0 0.0
        %802 = vmatpush1.msra.mxu0 0.0
        %803 = vmatprep.subr.mxu0 0.0
        %804 = vmatpush1.msra.mxu0 0.0
        %805 = vmatprep.subr.mxu0 0.0
        %806 = vmatpush1.msra.mxu0 0.0
        %807 = vmatprep.subr.mxu0 0.0
        %808 = vmatpush1.msra.mxu0 0.0
        %809 = vmatprep.subr.mxu0 0.0
        %810 = vmatpush1.msra.mxu0 0.0
        %811 = vmatprep.subr.mxu0 0.0
        %812 = vmatpush1.msra.mxu0 0.0
        %813 = vmatprep.subr.mxu0 0.0
        %814 = vmatpush1.msra.mxu0 0.0
        %815 = vmatprep.subr.mxu0 0.0
        %816 = vmatpush1.msra.mxu0 0.0
        %817 = vmatprep.subr.mxu0 0.0
        %818 = vmatpush1.msra.mxu0 0.0
        %819 = vmatprep.subr.mxu0 0.0
        %820 = vmatpush1.msra.mxu0 0.0
        %821 = vmatprep.subr.mxu0 0.0
        %822 = vmatpush1.msra.mxu0 0.0
        %823 = vmatprep.subr.mxu0 0.0
        %824 = vmatpush1.msra.mxu0 0.0
        %825 = vmatprep.subr.mxu0 0.0
        %826 = vmatpush1.msra.mxu0 0.0
        %827 = vmatprep.subr.mxu0 0.0
        %828 = vmatpush1.msra.mxu0 0.0
        %829 = vmatprep.subr.mxu0 0.0
        %830 = vmatpush1.msra.mxu0 0.0
        %831 = vmatprep.subr.mxu0 0.0
        %832 = vmatpush1.msra.mxu0 0.0
        %833 = vmatprep.subr.mxu0 0.0
        %834 = vmatpush1.msra.mxu0 0.0
        %835 = vmatprep.subr.mxu0 0.0
        %836 = vmatpush1.msra.mxu0 0.0
        %837 = vmatprep.subr.mxu0 0.0
        %838 = vmatpush1.msra.mxu0 0.0
        %839 = vmatprep.subr.mxu0 0.0
        %840 = vmatpush1.msra.mxu0 0.0
        %841 = vmatprep.subr.mxu0 0.0
        %842 = vmatpush1.msra.mxu0 0.0
        %843 = vmatprep.subr.mxu0 0.0
        %844 = vmatpush1.msra.mxu0 0.0
        %845 = vmatprep.subr.mxu0 0.0
        %846 = vmatpush1.msra.mxu0 0.0
        %847 = vmatprep.subr.mxu0 0.0
        %848 = vmatpush1.msra.mxu0 0.0
        %849 = vmatprep.subr.mxu0 0.0
        %850 = vmatpush1.msra.mxu0 0.0
        %851 = vmatprep.subr.mxu0 0.0
        %852 = vmatpush1.msra.mxu0 0.0
        %853 = vmatprep.subr.mxu0 0.0
        %854 = vmatpush1.msra.mxu0 0.0
        %855 = vmatprep.subr.mxu0 0.0
        %856 = vmatpush1.msra.mxu0 0.0
        %857 = vmatprep.subr.mxu0 0.0
        %858 = vmatpush1.msra.mxu0 0.0
        %859 = vmatprep.mubr.f32.mxu0 0.0
        %860 = vmatmul.mubr.f32.gmra.mrb[0].mxu0 %v793
        %v861 = vpop.f32.mrb[0].mxu0
        %v862 = vadd.f32 0.0, %v861
        %v863 = vpop.f32.mrb[0].mxu0
        %864 = vdwg.mxu0
        %865 = vst.msk [vmem:[%s273] sm:$0xff] %vm553, %v862
        %s866 = sand.u32 %s164, 1
        %s867 = scalar_lea.sflag [#allocation3], %s866
        %s868 = sand.u32 %s164, 1
        %s869 = smul.addr %s868, 8
        %s870 = scalar_lea.vmem [#allocation2], %s869
        %s871 = sand.u32 %s190, 1
        %s872 = scalar_lea.sflag [#allocation5], %s871
        %s873 = sand.u32 %s190, 1
        %s874 = smul.addr %s873, 8
        %s875 = scalar_lea.vmem [#allocation4], %s874
        // Predicated region
        $region45: #{tpu_custom_call.1} parent=43 // pred_check
          %p876 = pneg %p174
        $region46: #{tpu_custom_call.1} parent=43 // pred_check_branch
          %878 = sbr.rel (%p876) target = $region48
        $region47: #{tpu_custom_call.1} parent=43 // pred_region
          %s880 = ssub.s32 128, 128
          %881 = vsyncadd %s867, %s880
          %s882 = smul.addr %s25, 128
          %s883 = scalar_lea.hbm %s6, %s882
          %s885 = sshll.u32 %s870, 4
          %s886 = int_to_ptr.vmem [resolvable:$true] %s885
          %888 = dma.vmem_to_hbm [thread:$0]  %s886, 128, %s883, %s867
        $region48: #{tpu_custom_call.1} parent=43 // pred_fallthru
          _
        // Predicated region
        $region49: #{tpu_custom_call.1} parent=43 // pred_check
          %p889 = pneg %p200
        $region50: #{tpu_custom_call.1} parent=43 // pred_check_branch
          %891 = sbr.rel (%p889) target = $region52
        $region51: #{tpu_custom_call.1} parent=43 // pred_region
          %s893 = ssub.s32 128, 128
          %894 = vsyncadd %s872, %s893
          %s895 = smul.addr %s25, 128
          %s896 = scalar_lea.hbm %s7, %s895
          %s898 = sshll.u32 %s875, 4
          %s899 = int_to_ptr.vmem [resolvable:$true] %s898
          %901 = dma.vmem_to_hbm [thread:$0]  %s899, 128, %s896, %s872
        $region52: #{tpu_custom_call.1} parent=43 // pred_fallthru
          _
      $region44: #{tpu_custom_call.1} parent=5 // pred_fallthru
        _
      %p902 = scmp.le.s32.totalorder 2, %s20
      // Predicated region
      $region53: #{tpu_custom_call.1} parent=5 // pred_check
        %p903 = pneg %p902
      $region54: #{tpu_custom_call.1} parent=5 // pred_check_branch
        %905 = sbr.rel (%p903) target = $region56
      $region55: #{tpu_custom_call.1} parent=5 // pred_region
        %s906 = ssub.s32 %s20, 2
        // Predicated region
        $region57: #{tpu_custom_call.1} parent=55 // pred_check
          %p907 = pneg %p180
        $region58: #{tpu_custom_call.1} parent=55 // pred_check_branch
          %909 = sbr.rel (%p907) target = $region60
        $region59: #{tpu_custom_call.1} parent=55 // pred_region
          %s910 = sand.u32 %s165, 1
          %s911 = scalar_lea.sflag [#allocation3], %s910
          %s912 = sand.u32 %s165, 1
          %s913 = smul.addr %s912, 8
          %s914 = scalar_lea.vmem [#allocation2], %s913
          %915 = dma.done %s911, 128
        $region60: #{tpu_custom_call.1} parent=55 // pred_fallthru
          _
        // Predicated region
        $region61: #{tpu_custom_call.1} parent=55 // pred_check
          %p916 = pneg %p206
        $region62: #{tpu_custom_call.1} parent=55 // pred_check_branch
          %918 = sbr.rel (%p916) target = $region64
        $region63: #{tpu_custom_call.1} parent=55 // pred_region
          %s919 = sand.u32 %s191, 1
          %s920 = scalar_lea.sflag [#allocation5], %s919
          %s921 = sand.u32 %s191, 1
          %s922 = smul.addr %s921, 8
          %s923 = scalar_lea.vmem [#allocation4], %s922
          %924 = dma.done %s920, 128
        $region64: #{tpu_custom_call.1} parent=55 // pred_fallthru
          _
      $region56: #{tpu_custom_call.1} parent=5 // pred_fallthru
        _
    $region6: #{tpu_custom_call.1} parent=1 // loop_footer
      %s24 = sadd.s32 1, %s20
    $region7: #{tpu_custom_call.1} parent=1 // loop_footer_branch
      %19 = sbr.rel target = $region3
    $region8: #{tpu_custom_call.1} parent=1 // loop_exit
      _
    %925 = vsyncpa [#allocation3], 1
    %s926 = scalar_lea.sflag [#allocation3], 1
    %927 = vsyncpa %s926, 1
    %928 = vsyncpa [#allocation5], 1
    %s929 = scalar_lea.sflag [#allocation5], 1
    %930 = vsyncpa %s929, 1

</llo_original>
